<compile_context>
chip_gen: v6e
topology: v6e:2x2x1
jax: 0.10.0
libtpu: 0.0.40
codegen_flags: <defaults>
</compile_context>

<pallas_src>
import functools
import numpy as np
import jax
import jax.numpy as jnp
from jax.experimental import pallas as pl
from jax.experimental.pallas import tpu as pltpu


# ----------------------------- helpers ---------------------------------------

def _softplus(x):
    # matches torch.nn.Softplus(beta=1, threshold=20)
    return jnp.where(x > 20.0, x, jnp.log1p(jnp.exp(jnp.minimum(x, 20.0))))


def _factorial(n):
    return 1 if n == 0 else n * _factorial(n - 1)


# ----------------------------- kernel ----------------------------------------
#
# a_ref : (2, K, TB)  rows: A[i]^T, A[j]^T               (B on lanes)
# s_ref : (F, TB)     packed per-sample scalars          (B on lanes)
#   row 0: invT, 1: r, 2: NAa, 3: NAd,
#   4: rhoBam, 5: rhoAap, 6: rhoBdm, 7: rhoAdp,
#   8: D[j,0], 9: D[i,0], 10: D[j,1], 11: D[i,1],
#   12..12+NA-1: Alpha[i], 12+NA..12+2NA-1: Alpha[j]   (rest: padding)
# p_ref : (K, 2+NT)   columns: O_soft[:,0], O_soft[:,1], T_soft[:, 0..NT-1]
# out   : (1, TB)

def nrtl_kernel(a_ref, s_ref, p_ref, out_ref, *, n_alpha, n_t, exps, coeffs,
                int_pow):
    # ---------------- NRTL part (K on sublanes, B on lanes) -------------------
    A_i = a_ref[0]                               # (K, TB)
    A_j = a_ref[1]                               # (K, TB)
    A_i_c = jnp.maximum(A_i, 0.0)
    A_j_c = jnp.maximum(A_j, 0.0)

    p = p_ref[...]                               # (K, 2+NT)
    w0 = p[:, 0:1]                               # (K, 1)
    w1 = p[:, 1:2]                               # (K, 1)

    A_combined = A_i_c * A_j_c * w0 + (A_i - A_j) ** 2 * w1      # (K, TB)
    diff_i = A_combined - (A_i_c * A_i_c) * w0   # = A_combined - p_i-contrib
    diff_j = A_combined - (A_j_c * A_j_c) * w0

    s = s_ref[...]                               # (F, TB)
    invT = s[0:1, :]                             # (1, TB)

    # Tmat^T rows: row t = coeffs[t] * invT**exps[t]   (all (1, TB))
    if int_pow:
        max_e = int(max(exps))
        pow_cache = {}
        cur = invT
        for e in range(1, max_e + 1):
            pow_cache[e] = cur
            cur = cur * invT
        rows = []
        for t in range(n_t):
            e = int(exps[t])
            if e == 0:
                rows.append(jnp.full_like(invT, coeffs[t]))
            elif coeffs[t] == 1.0:
                rows.append(pow_cache[e])
            else:
                rows.append(coeffs[t] * pow_cache[e])
    else:
        log_invT = jnp.log(invT)                 # single log, reused
        rows = [coeffs[t] * jnp.exp(exps[t] * log_invT) for t in range(n_t)]

    # W[k, b] = sum_t T_soft[k, t] * Tmat[b, t]  — VPU broadcast-accumulate
    # (NT is tiny; avoids any MXU push/drain).
    W = p[:, 2:3] * rows[0]                      # (K, TB)
    for t in range(1, n_t):
        W = W + p[:, 2 + t:3 + t] * rows[t]

    # u_ij = sum_t (A_ct - p_j)*Tmat == sum_k diff_j * W   (sublane reduce)
    u_ij = jnp.sum(diff_j * W, axis=0, keepdims=True)   # (1, TB)
    u_ji = jnp.sum(diff_i * W, axis=0, keepdims=True)   # (1, TB)

    na = n_alpha
    al = jnp.clip(s[12:12 + 2 * na, :], 0.0, 1.0)       # (2*NA, TB)
    dal = al[0:na, :] - al[na:2 * na, :]
    d2 = dal * dal
    alpha_ij = d2[0:1, :]
    for a_ix in range(1, na):                            # explicit slice-adds
        alpha_ij = alpha_ij + d2[a_ix:a_ix + 1, :]

    result = u_ji + u_ij * jnp.exp(-alpha_ij * u_ij)     # (1, TB)

    # ---------------- Wertheim association (all lane-dense (., TB)) ----------
    r_v = s[1:2, :]
    N2 = s[2:4, :]                                       # [NAa, NAd]
    rhoBam = s[4:5, :]
    rhoBdm = s[6:7, :]
    rho_a2 = s[4:6, :]                                   # [rhoBam, rhoAap]
    rho_d2 = s[6:8, :]                                   # [rhoBdm, rhoAdp]

    dref = 0.034 * (jnp.exp(1960.0 * invT) - 1.0)        # (1, TB)
    D_sp = _softplus(s[8:12, :])                         # [Dj0, Di0, Dj1, Di1]
    Dpair2 = D_sp[0:2, :] * D_sp[2:4, :] * dref          # [D_BaBd, D_AaAd]
    D_AaBd = D_sp[1:2, :] * D_sp[2:3, :] * dref          # D[i,0]*D[j,1]*dref
    D_AdBa = D_sp[0:1, :] * D_sp[3:4, :] * dref          # D[j,0]*D[i,1]*dref

    # both pair_X evaluations stacked into one (2, TB) computation
    m_a0 = rho_a2 == 0.0
    m_d0 = rho_d2 == 0.0
    adj_a = jnp.where(m_a0, 1.0, Dpair2 * rho_a2)
    adj_d = jnp.where(m_d0, 1.0, Dpair2 * rho_d2)
    inv_2a = 0.5 / adj_a
    inv_2d = 0.5 / adj_d
    # safe denominators: value is discarded by the where() when rho == 0
    rho_a_safe = jnp.where(m_a0, 1.0, rho_a2)
    rho_d_safe = jnp.where(m_d0, 1.0, rho_d2)
    sq_a = jnp.sqrt(adj_a * adj_a - 2.0 * adj_a * (adj_d - 1.0)
                    + (adj_d + 1.0) ** 2)
    sq_d = jnp.sqrt(adj_d * adj_d - 2.0 * adj_d * (adj_a - 1.0)
                    + (adj_a + 1.0) ** 2)
    Xa_tmp = sq_a * inv_2a + 0.5 - rho_d2 * (0.5 / rho_a_safe) - inv_2a
    Xd_tmp = sq_d * inv_2d + 0.5 - rho_a2 * (0.5 / rho_d_safe) - inv_2d
    Xa2 = jnp.where(m_d0, 1.0, jnp.where(m_a0, 2.0 * inv_2d, Xa_tmp))
    Xd2 = jnp.where(m_a0, 1.0, jnp.where(m_d0, 2.0 * inv_2a, Xd_tmp))

    XaBm = Xa2[0:1, :]
    XaAp = Xa2[1:2, :]
    XdBm = Xd2[0:1, :]
    XdAp = Xd2[1:2, :]

    # XaAm = 1/(1+zA), XdAm = 1/(1+zD)  =>  log(X.Am / X.Ap) = -log((1+z)*X.Ap)
    zAD = jnp.concatenate([D_AaBd * rhoBdm * XdBm,
                           D_AdBa * rhoBam * XaBm], axis=0)       # (2, TB)
    XAp2 = jnp.concatenate([XaAp, XdAp], axis=0)                  # (2, TB)
    lg = -jnp.log((1.0 + zAD) * XAp2) + (XAp2 - 1.0) * 0.5        # (2, TB)
    termsA = jnp.where(N2 == 0.0, 0.0, N2 * lg)
    termB = r_v * 0.5 * (rhoBam * (1.0 - XaBm) + rhoBdm * (1.0 - XdBm))
    asc = termsA[0:1, :] + termsA[1:2, :] + termB                 # (1, TB)

    out_ref[...] = asc + result                                   # lane-dense


# ----------------------------- wrapper ----------------------------------------

def make_nrtl_forward(temp_exponents, taylor_coeffs):
    """Factory: bakes the (static) temperature exponents / Taylor coeffs."""
    exps_np = np.asarray(temp_exponents, dtype=np.float64).reshape(-1)
    if taylor_coeffs is None:
        coeffs_np = np.ones_like(exps_np)
    else:
        coeffs_np = np.asarray(taylor_coeffs, dtype=np.float64).reshape(-1)
    exps = tuple(float(e) for e in exps_np)
    coeffs = tuple(float(c) for c in coeffs_np)
    n_t = len(exps)
    int_pow = all(e >= 0.0 and float(e).is_integer() and e <= 8 for e in exps)

    @jax.jit
    def forward(Alpha, A, T, O, D, i_idx, j_idx, invT, r, qA, qB, N, rho):
        del qA, qB  # present in the torch signature, unused by the forward
        B = invT.shape[0]
        K = A.shape[1]
        NA = Alpha.shape[1]

        # ---- parameter-only work hoisted out of the kernel ------------------
        O_soft = jax.nn.softmax(O, axis=1)                       # (K, 2)
        T_soft = jax.nn.softmax(T, axis=1)                       # (K, NT)
        param_slab = jnp.concatenate([O_soft, T_soft],
                                     axis=1).astype(jnp.float32)  # (K, 2+NT)

        # ---- gathers + packing (glue); B goes on the lane axis --------------
        A_slab = jnp.stack([A[i_idx], A[j_idx]], axis=0)          # (2, B, K)
        A_slab = jnp.transpose(A_slab, (0, 2, 1)).astype(jnp.float32)  # (2,K,B)

        D_i = D[i_idx]
        D_j = D[j_idx]
        scal = jnp.concatenate([
            invT.reshape(B, 1), r.reshape(B, 1),
            N.reshape(B, 2),
            rho[:, 2:3], rho[:, 0:1], rho[:, 3:4], rho[:, 1:2],
            D_j[:, 0:1], D_i[:, 0:1], D_j[:, 1:2], D_i[:, 1:2],
            Alpha[i_idx], Alpha[j_idx],
        ], axis=1).astype(jnp.float32)                            # (B, 12+2NA)
        scal = scal.T                                             # (F0, B)
        F0 = 12 + 2 * NA
        F = ((F0 + 7) // 8) * 8
        if F != F0:
            scal = jnp.pad(scal, ((0, F - F0), (0, 0)))

        # ---- tile over B on the lane axis ------------------------------------
        TB = B if B <= 2048 else 2048          # block fits comfortably in VMEM
        grid_b = -(-B // TB)
        B_pad = grid_b * TB
        if B_pad != B:
            A_slab = jnp.pad(A_slab, ((0, 0), (0, 0), (0, B_pad - B)))
            pad_cols = jnp.zeros((F, B_pad - B), jnp.float32).at[0, :].set(1.0)
            scal = jnp.concatenate([scal, pad_cols], axis=1)

        kernel = functools.partial(nrtl_kernel, n_alpha=NA, n_t=n_t,
                                   exps=exps, coeffs=coeffs, int_pow=int_pow)

        out = pl.pallas_call(
            kernel,
            out_shape=jax.ShapeDtypeStruct((1, B_pad), jnp.float32),
            grid=(grid_b,),
            in_specs=[
                pl.BlockSpec((2, K, TB), lambda b: (0, 0, b)),
                pl.BlockSpec((F, TB), lambda b: (0, b)),
                pl.BlockSpec((K, 2 + n_t), lambda b: (0, 0)),  # resident params
            ],
            out_specs=pl.BlockSpec((1, TB), lambda b: (0, b)),
            compiler_params=pltpu.CompilerParams(
                dimension_semantics=("parallel",)),
        )(A_slab, scal, param_slab)

        return out[0, :B][:, None]                                # (B, 1)

    return forward


# ----------------------------- pure-JAX reference -----------------------------

def nrtl_reference(Alpha, A, T, O, D, exps, coeffs,
                   i_idx, j_idx, invT, r, qA, qB, N, rho):
    A_i, A_j = A[i_idx], A[j_idx]
    A_i_c, A_j_c = jnp.maximum(A_i, 0.0), jnp.maximum(A_j, 0.0)
    A_prod = A_i_c * A_j_c
    A_dif = (A_i - A_j) ** 2
    O_soft = jax.nn.softmax(O, axis=1)       # (K, 2)
    A_combined = A_prod * O_soft[:, 0] + A_dif * O_soft[:, 1]
    A_i_comb = (A_i_c * A_i_c) * O_soft[:, 0]
    A_j_comb = (A_j_c * A_j_c) * O_soft[:, 0]
    T_soft = jax.nn.softmax(T, axis=1)
    A_ct = A_combined @ T_soft
    p_i = A_i_comb @ T_soft
    p_j = A_j_comb @ T_soft
    al_i = jnp.clip(Alpha[i_idx], 0.0, 1.0)
    al_j = jnp.clip(Alpha[j_idx], 0.0, 1.0)
    alpha_ij = jnp.sum((al_i - al_j) ** 2, axis=1, keepdims=True)
    Tmat = jnp.power(invT, exps) * coeffs
    u_ij = jnp.sum((A_ct - p_j) * Tmat, axis=1, keepdims=True)
    u_ji = jnp.sum((A_ct - p_i) * Tmat, axis=1, keepdims=True)
    result = u_ji + u_ij * jnp.exp(-alpha_ij * u_ij)

    # Wertheim
    D_sp = _softplus(D)
    Di, Dj = D_sp[i_idx], D_sp[j_idx]
    rhoAap, rhoAdp = rho[:, 0:1], rho[:, 1:2]
    rhoBam, rhoBdm = rho[:, 2:3], rho[:, 3:4]
    NAa, NAd = N[:, 0:1], N[:, 1:2]
    dref = 0.034 * (jnp.exp(1960.0 * invT) - 1.0)
    D_AaAd = Di[:, 0:1] * Di[:, 1:2] * dref
    D_BaBd = Dj[:, 0:1] * Dj[:, 1:2] * dref
    D_AaBd = Di[:, 0:1] * Dj[:, 1:2] * dref
    D_AdBa = Dj[:, 0:1] * Di[:, 1:2] * dref

    def pair_X(Dpair, rho_a, rho_d):
        a, d = Dpair * rho_a, Dpair * rho_d
        m_a0, m_d0 = rho_a == 0.0, rho_d == 0.0
        adj_a = jnp.where(m_a0, 1.0, a)
        adj_d = jnp.where(m_d0, 1.0, d)
        Xa_tmp = (jnp.sqrt(adj_a ** 2 - 2 * adj_a * (adj_d - 1) + (adj_d + 1) ** 2)
                  / (2 * adj_a) + 0.5 - rho_d / (2 * rho_a) - 1 / (2 * adj_a))
        Xd_tmp = (jnp.sqrt(adj_d ** 2 - 2 * adj_d * (adj_a - 1) + (adj_a + 1) ** 2)
                  / (2 * adj_d) + 0.5 - rho_a / (2 * rho_d) - 1 / (2 * adj_d))
        Xa = jnp.where(m_d0, 1.0, jnp.where(m_a0, 1.0 / adj_d, Xa_tmp))
        Xd = jnp.where(m_a0, 1.0, jnp.where(m_d0, 1.0 / adj_a, Xd_tmp))
        return Xa, Xd

    XaBm, XdBm = pair_X(D_BaBd, rhoBam, rhoBdm)
    XaAp, XdAp = pair_X(D_AaAd, rhoAap, rhoAdp)
    XaAm = 1.0 / (1.0 + D_AaBd * rhoBdm * XdBm)
    XdAm = 1.0 / (1.0 + D_AdBa * rhoBam * XaBm)
    termAa = jnp.where(NAa == 0.0, 0.0,
                       NAa * (jnp.log(XaAm / XaAp) + (XaAp - 1.0) / 2.0))
    termAd = jnp.where(NAd == 0.0, 0.0,
                       NAd * (jnp.log(XdAm / XdAp) + (XdAp - 1.0) / 2.0))
    termB = r * (rhoBam * (1.0 - XaBm) / 2.0 + rhoBdm * (1.0 - XdBm) / 2.0)
    asc = termAa + termAd + termB
    return asc + result


# ----------------------------- main --------------------------------------------

if __name__ == "__main__":
    B = 8          # batch of (i, j, T) queries
    K = 32         # number of latent interaction features
    NT = 3         # number of temperature-dependence terms
    NA = 2         # alpha dimensionality
    NC = 6         # number of components

    key = jax.random.PRNGKey(0)
    ks = jax.random.split(key, 14)

    # deterministic "parameters" (shapes per the torch __init__)
    Alpha = jax.random.uniform(ks[0], (NC, NA), jnp.float32)
    A = 0.5 * jax.random.normal(ks[1], (NC, K), jnp.float32)
    T = 0.1 * jax.random.normal(ks[2], (K, NT), jnp.float32)
    O = 0.1 * jax.random.normal(ks[3], (K, 2), jnp.float32)
    D = 0.5 * jax.random.normal(ks[4], (NC, 2), jnp.float32)

    temp_exponents = np.array([0, 1, 2])
    # min==0 & max>0 -> Taylor coefficients 1/|e|!
    taylor_coeffs = 1.0 / np.array([_factorial(abs(int(e)))
                                    for e in temp_exponents], dtype=np.float64)
    exps_arr = jnp.asarray(temp_exponents, jnp.float32)[None, :]      # (1, NT)
    coeffs_arr = jnp.asarray(taylor_coeffs, jnp.float32)[None, :]     # (1, NT)

    # deterministic example inputs
    i_idx = jax.random.randint(ks[5], (B,), 0, NC)
    j_idx = jax.random.randint(ks[6], (B,), 0, NC)
    invT = 1.0 / jax.random.uniform(ks[7], (B, 1), jnp.float32, 250.0, 400.0)
    r = jax.random.uniform(ks[8], (B, 1), jnp.float32, 0.5, 3.0)
    qA = jax.random.uniform(ks[9], (B, 1), jnp.float32, 0.5, 3.0)   # unused
    qB = jax.random.uniform(ks[10], (B, 1), jnp.float32, 0.5, 3.0)  # unused
    N = jax.random.randint(ks[11], (B, 2), 0, 3).astype(jnp.float32)
    rho_raw = jax.random.uniform(ks[12], (B, 4), jnp.float32, 0.1, 2.0)
    rho = jnp.where(jax.random.bernoulli(ks[13], 0.3, (B, 4)), 0.0, rho_raw)

    nrtl_forward = make_nrtl_forward(temp_exponents, taylor_coeffs)
    out = nrtl_forward(Alpha, A, T, O, D, i_idx, j_idx, invT, r, qA, qB, N, rho)
    out = jax.block_until_ready(out)

    ref = nrtl_reference(Alpha, A, T, O, D, exps_arr, coeffs_arr,
                         i_idx, j_idx, invT, r, qA, qB, N, rho)
    np.testing.assert_allclose(np.asarray(out), np.asarray(ref),
                               rtol=1e-4, atol=1e-4)
    print("KERNEL_OK")
</pallas_src>

<mosaic_0001>
module attributes {stable_mosaic.version = 11 : i64} {
  func.func @nrtl_kernel(%arg0: i32, %arg1: memref<2x32x8xf32, #tpu.memory_space<vmem>>, %arg2: memref<16x8xf32, #tpu.memory_space<vmem>>, %arg3: memref<32x5xf32, #tpu.memory_space<vmem>>, %arg4: memref<1x8xf32, #tpu.memory_space<vmem>>) attributes {dimension_semantics = [#tpu.dimension_semantics<parallel>], iteration_bounds = array<i64: 1>, scalar_prefetch = 0 : i64, scratch_operands = 0 : i64, tpu.core_type = #tpu.core_type<tc>, window_params = [{transform_indices = @transform_0, window_bounds = array<i64: 2, 32, 8>}, {transform_indices = @transform_1, window_bounds = array<i64: 16, 8>}, {pipeline_mode = #tpu.pipeline_mode<synchronous>, transform_indices = @transform_2, window_bounds = array<i64: 32, 5>}, {transform_indices = @transform_3, window_bounds = array<i64: 1, 8>}]} {
    %c0 = arith.constant 0 : index
    %c0_0 = arith.constant 0 : index
    %c0_1 = arith.constant 0 : index
    %0 = vector.load %arg1[%c0, %c0_0, %c0_1] : memref<2x32x8xf32, #tpu.memory_space<vmem>>, vector<1x32x8xf32>
    %1 = vector.shape_cast %0 : vector<1x32x8xf32> to vector<32x8xf32>
    %c1 = arith.constant 1 : index
    %c0_2 = arith.constant 0 : index
    %c0_3 = arith.constant 0 : index
    %2 = vector.load %arg1[%c1, %c0_2, %c0_3] : memref<2x32x8xf32, #tpu.memory_space<vmem>>, vector<1x32x8xf32>
    %3 = vector.shape_cast %2 : vector<1x32x8xf32> to vector<32x8xf32>
    %cst = arith.constant 0.000000e+00 : f32
    %4 = vector.broadcast %cst : f32 to vector<32x8xf32>
    %5 = arith.maximumf %1, %4 : vector<32x8xf32>
    %cst_4 = arith.constant 0.000000e+00 : f32
    %6 = vector.broadcast %cst_4 : f32 to vector<32x8xf32>
    %7 = arith.maximumf %3, %6 : vector<32x8xf32>
    %c0_5 = arith.constant 0 : index
    %c0_6 = arith.constant 0 : index
    %8 = vector.load %arg3[%c0_5, %c0_6] : memref<32x5xf32, #tpu.memory_space<vmem>>, vector<32x5xf32>
    %9 = vector.extract_strided_slice %8 {offsets = [0, 0], sizes = [32, 1], strides = [1, 1]} : vector<32x5xf32> to vector<32x1xf32>
    %10 = vector.extract_strided_slice %8 {offsets = [0, 1], sizes = [32, 1], strides = [1, 1]} : vector<32x5xf32> to vector<32x1xf32>
    %11 = arith.mulf %5, %7 : vector<32x8xf32>
    %12 = vector.broadcast %9 : vector<32x1xf32> to vector<32x8xf32>
    %13 = arith.mulf %11, %12 : vector<32x8xf32>
    %14 = arith.subf %1, %3 : vector<32x8xf32>
    %15 = arith.mulf %14, %14 : vector<32x8xf32>
    %16 = vector.broadcast %10 : vector<32x1xf32> to vector<32x8xf32>
    %17 = arith.mulf %15, %16 : vector<32x8xf32>
    %18 = arith.addf %13, %17 : vector<32x8xf32>
    %19 = arith.mulf %5, %5 : vector<32x8xf32>
    %20 = vector.broadcast %9 : vector<32x1xf32> to vector<32x8xf32>
    %21 = arith.mulf %19, %20 : vector<32x8xf32>
    %22 = arith.subf %18, %21 : vector<32x8xf32>
    %23 = arith.mulf %7, %7 : vector<32x8xf32>
    %24 = vector.broadcast %9 : vector<32x1xf32> to vector<32x8xf32>
    %25 = arith.mulf %23, %24 : vector<32x8xf32>
    %26 = arith.subf %18, %25 : vector<32x8xf32>
    %c0_7 = arith.constant 0 : index
    %c0_8 = arith.constant 0 : index
    %27 = vector.load %arg2[%c0_7, %c0_8] : memref<16x8xf32, #tpu.memory_space<vmem>>, vector<16x8xf32>
    %28 = vector.extract_strided_slice %27 {offsets = [0, 0], sizes = [1, 8], strides = [1, 1]} : vector<16x8xf32> to vector<1x8xf32>
    %29 = arith.mulf %28, %28 : vector<1x8xf32>
    %cst_9 = arith.constant 1.000000e+00 : f32
    %30 = vector.broadcast %cst_9 : f32 to vector<1x8xf32>
    %cst_10 = arith.constant 5.000000e-01 : f32
    %31 = vector.broadcast %cst_10 : f32 to vector<1x8xf32>
    %32 = arith.mulf %31, %29 : vector<1x8xf32>
    %33 = vector.extract_strided_slice %8 {offsets = [0, 2], sizes = [32, 1], strides = [1, 1]} : vector<32x5xf32> to vector<32x1xf32>
    %34 = vector.broadcast %33 : vector<32x1xf32> to vector<32x8xf32>
    %35 = vector.broadcast %30 : vector<1x8xf32> to vector<32x8xf32>
    %36 = arith.mulf %34, %35 : vector<32x8xf32>
    %37 = vector.extract_strided_slice %8 {offsets = [0, 3], sizes = [32, 1], strides = [1, 1]} : vector<32x5xf32> to vector<32x1xf32>
    %38 = vector.broadcast %37 : vector<32x1xf32> to vector<32x8xf32>
    %39 = vector.broadcast %28 : vector<1x8xf32> to vector<32x8xf32>
    %40 = arith.mulf %38, %39 : vector<32x8xf32>
    %41 = arith.addf %36, %40 : vector<32x8xf32>
    %42 = vector.extract_strided_slice %8 {offsets = [0, 4], sizes = [32, 1], strides = [1, 1]} : vector<32x5xf32> to vector<32x1xf32>
    %43 = vector.broadcast %42 : vector<32x1xf32> to vector<32x8xf32>
    %44 = vector.broadcast %32 : vector<1x8xf32> to vector<32x8xf32>
    %45 = arith.mulf %43, %44 : vector<32x8xf32>
    %46 = arith.addf %41, %45 : vector<32x8xf32>
    %47 = arith.mulf %26, %46 : vector<32x8xf32>
    %cst_11 = arith.constant dense<0.000000e+00> : vector<8xf32>
    %48 = vector.multi_reduction <add>, %47, %cst_11 [0] : vector<32x8xf32> to vector<8xf32>
    %49 = vector.shape_cast %48 : vector<8xf32> to vector<1x8xf32>
    %50 = arith.mulf %22, %46 : vector<32x8xf32>
    %cst_12 = arith.constant dense<0.000000e+00> : vector<8xf32>
    %51 = vector.multi_reduction <add>, %50, %cst_12 [0] : vector<32x8xf32> to vector<8xf32>
    %52 = vector.shape_cast %51 : vector<8xf32> to vector<1x8xf32>
    %53 = vector.extract_strided_slice %27 {offsets = [12, 0], sizes = [4, 8], strides = [1, 1]} : vector<16x8xf32> to vector<4x8xf32>
    %cst_13 = arith.constant 0.000000e+00 : f32
    %cst_14 = arith.constant 1.000000e+00 : f32
    %54 = vector.broadcast %cst_13 : f32 to vector<4x8xf32>
    %55 = arith.maximumf %54, %53 : vector<4x8xf32>
    %56 = vector.broadcast %cst_14 : f32 to vector<4x8xf32>
    %57 = arith.minimumf %56, %55 : vector<4x8xf32>
    %58 = vector.extract_strided_slice %57 {offsets = [0, 0], sizes = [2, 8], strides = [1, 1]} : vector<4x8xf32> to vector<2x8xf32>
    %59 = vector.extract_strided_slice %57 {offsets = [2, 0], sizes = [2, 8], strides = [1, 1]} : vector<4x8xf32> to vector<2x8xf32>
    %60 = arith.subf %58, %59 : vector<2x8xf32>
    %61 = arith.mulf %60, %60 : vector<2x8xf32>
    %62 = vector.extract_strided_slice %61 {offsets = [0, 0], sizes = [1, 8], strides = [1, 1]} : vector<2x8xf32> to vector<1x8xf32>
    %63 = vector.extract_strided_slice %61 {offsets = [1, 0], sizes = [1, 8], strides = [1, 1]} : vector<2x8xf32> to vector<1x8xf32>
    %64 = arith.addf %62, %63 : vector<1x8xf32>
    %cst_15 = arith.constant 0.000000e+00 : f32
    %65 = vector.broadcast %cst_15 : f32 to vector<1x8xf32>
    %66 = arith.subf %65, %64 : vector<1x8xf32>
    %67 = arith.mulf %66, %49 : vector<1x8xf32>
    %68 = math.exp %67 : vector<1x8xf32>
    %69 = arith.mulf %49, %68 : vector<1x8xf32>
    %70 = arith.addf %52, %69 : vector<1x8xf32>
    %71 = vector.extract_strided_slice %27 {offsets = [1, 0], sizes = [1, 8], strides = [1, 1]} : vector<16x8xf32> to vector<1x8xf32>
    %72 = vector.extract_strided_slice %27 {offsets = [2, 0], sizes = [2, 8], strides = [1, 1]} : vector<16x8xf32> to vector<2x8xf32>
    %73 = vector.extract_strided_slice %27 {offsets = [4, 0], sizes = [1, 8], strides = [1, 1]} : vector<16x8xf32> to vector<1x8xf32>
    %74 = vector.extract_strided_slice %27 {offsets = [6, 0], sizes = [1, 8], strides = [1, 1]} : vector<16x8xf32> to vector<1x8xf32>
    %75 = vector.extract_strided_slice %27 {offsets = [4, 0], sizes = [2, 8], strides = [1, 1]} : vector<16x8xf32> to vector<2x8xf32>
    %76 = vector.extract_strided_slice %27 {offsets = [6, 0], sizes = [2, 8], strides = [1, 1]} : vector<16x8xf32> to vector<2x8xf32>
    %cst_16 = arith.constant 1.960000e+03 : f32
    %77 = vector.broadcast %cst_16 : f32 to vector<1x8xf32>
    %78 = arith.mulf %77, %28 : vector<1x8xf32>
    %79 = math.exp %78 : vector<1x8xf32>
    %cst_17 = arith.constant 1.000000e+00 : f32
    %80 = vector.broadcast %cst_17 : f32 to vector<1x8xf32>
    %81 = arith.subf %79, %80 : vector<1x8xf32>
    %cst_18 = arith.constant 3.400000e-02 : f32
    %82 = vector.broadcast %cst_18 : f32 to vector<1x8xf32>
    %83 = arith.mulf %82, %81 : vector<1x8xf32>
    %84 = vector.extract_strided_slice %27 {offsets = [8, 0], sizes = [4, 8], strides = [1, 1]} : vector<16x8xf32> to vector<4x8xf32>
    %cst_19 = arith.constant 2.000000e+01 : f32
    %85 = vector.broadcast %cst_19 : f32 to vector<4x8xf32>
    %86 = arith.cmpf ogt, %84, %85 : vector<4x8xf32>
    %cst_20 = arith.constant 2.000000e+01 : f32
    %87 = vector.broadcast %cst_20 : f32 to vector<4x8xf32>
    %88 = arith.minimumf %84, %87 : vector<4x8xf32>
    %89 = math.exp %88 : vector<4x8xf32>
    %90 = math.log1p %89 : vector<4x8xf32>
    %91 = arith.select %86, %84, %90 : vector<4x8xi1>, vector<4x8xf32>
    %92 = vector.extract_strided_slice %91 {offsets = [0, 0], sizes = [2, 8], strides = [1, 1]} : vector<4x8xf32> to vector<2x8xf32>
    %93 = vector.extract_strided_slice %91 {offsets = [2, 0], sizes = [2, 8], strides = [1, 1]} : vector<4x8xf32> to vector<2x8xf32>
    %94 = arith.mulf %92, %93 : vector<2x8xf32>
    %95 = vector.broadcast %83 : vector<1x8xf32> to vector<2x8xf32>
    %96 = arith.mulf %94, %95 : vector<2x8xf32>
    %97 = vector.extract_strided_slice %91 {offsets = [1, 0], sizes = [1, 8], strides = [1, 1]} : vector<4x8xf32> to vector<1x8xf32>
    %98 = vector.extract_strided_slice %91 {offsets = [2, 0], sizes = [1, 8], strides = [1, 1]} : vector<4x8xf32> to vector<1x8xf32>
    %99 = arith.mulf %97, %98 : vector<1x8xf32>
    %100 = arith.mulf %99, %83 : vector<1x8xf32>
    %101 = vector.extract_strided_slice %91 {offsets = [0, 0], sizes = [1, 8], strides = [1, 1]} : vector<4x8xf32> to vector<1x8xf32>
    %102 = vector.extract_strided_slice %91 {offsets = [3, 0], sizes = [1, 8], strides = [1, 1]} : vector<4x8xf32> to vector<1x8xf32>
    %103 = arith.mulf %101, %102 : vector<1x8xf32>
    %104 = arith.mulf %103, %83 : vector<1x8xf32>
    %cst_21 = arith.constant 0.000000e+00 : f32
    %105 = vector.broadcast %cst_21 : f32 to vector<2x8xf32>
    %106 = arith.cmpf oeq, %75, %105 : vector<2x8xf32>
    %cst_22 = arith.constant 0.000000e+00 : f32
    %107 = vector.broadcast %cst_22 : f32 to vector<2x8xf32>
    %108 = arith.cmpf oeq, %76, %107 : vector<2x8xf32>
    %109 = arith.mulf %96, %75 : vector<2x8xf32>
    %cst_23 = arith.constant 1.000000e+00 : f32
    %110 = vector.broadcast %cst_23 : f32 to vector<2x8xf32>
    %111 = arith.select %106, %110, %109 : vector<2x8xi1>, vector<2x8xf32>
    %112 = arith.mulf %96, %76 : vector<2x8xf32>
    %cst_24 = arith.constant 1.000000e+00 : f32
    %113 = vector.broadcast %cst_24 : f32 to vector<2x8xf32>
    %114 = arith.select %108, %113, %112 : vector<2x8xi1>, vector<2x8xf32>
    %cst_25 = arith.constant 5.000000e-01 : f32
    %115 = vector.broadcast %cst_25 : f32 to vector<2x8xf32>
    %116 = arith.divf %115, %111 : vector<2x8xf32>
    %cst_26 = arith.constant 5.000000e-01 : f32
    %117 = vector.broadcast %cst_26 : f32 to vector<2x8xf32>
    %118 = arith.divf %117, %114 : vector<2x8xf32>
    %cst_27 = arith.constant 1.000000e+00 : f32
    %119 = vector.broadcast %cst_27 : f32 to vector<2x8xf32>
    %120 = arith.select %106, %119, %75 : vector<2x8xi1>, vector<2x8xf32>
    %cst_28 = arith.constant 1.000000e+00 : f32
    %121 = vector.broadcast %cst_28 : f32 to vector<2x8xf32>
    %122 = arith.select %108, %121, %76 : vector<2x8xi1>, vector<2x8xf32>
    %123 = arith.mulf %111, %111 : vector<2x8xf32>
    %cst_29 = arith.constant 2.000000e+00 : f32
    %124 = vector.broadcast %cst_29 : f32 to vector<2x8xf32>
    %125 = arith.mulf %124, %111 : vector<2x8xf32>
    %cst_30 = arith.constant 1.000000e+00 : f32
    %126 = vector.broadcast %cst_30 : f32 to vector<2x8xf32>
    %127 = arith.subf %114, %126 : vector<2x8xf32>
    %128 = arith.mulf %125, %127 : vector<2x8xf32>
    %129 = arith.subf %123, %128 : vector<2x8xf32>
    %cst_31 = arith.constant 1.000000e+00 : f32
    %130 = vector.broadcast %cst_31 : f32 to vector<2x8xf32>
    %131 = arith.addf %114, %130 : vector<2x8xf32>
    %132 = arith.mulf %131, %131 : vector<2x8xf32>
    %133 = arith.addf %129, %132 : vector<2x8xf32>
    %134 = math.sqrt %133 : vector<2x8xf32>
    %135 = arith.mulf %114, %114 : vector<2x8xf32>
    %cst_32 = arith.constant 2.000000e+00 : f32
    %136 = vector.broadcast %cst_32 : f32 to vector<2x8xf32>
    %137 = arith.mulf %136, %114 : vector<2x8xf32>
    %cst_33 = arith.constant 1.000000e+00 : f32
    %138 = vector.broadcast %cst_33 : f32 to vector<2x8xf32>
    %139 = arith.subf %111, %138 : vector<2x8xf32>
    %140 = arith.mulf %137, %139 : vector<2x8xf32>
    %141 = arith.subf %135, %140 : vector<2x8xf32>
    %cst_34 = arith.constant 1.000000e+00 : f32
    %142 = vector.broadcast %cst_34 : f32 to vector<2x8xf32>
    %143 = arith.addf %111, %142 : vector<2x8xf32>
    %144 = arith.mulf %143, %143 : vector<2x8xf32>
    %145 = arith.addf %141, %144 : vector<2x8xf32>
    %146 = math.sqrt %145 : vector<2x8xf32>
    %147 = arith.mulf %134, %116 : vector<2x8xf32>
    %cst_35 = arith.constant 5.000000e-01 : f32
    %148 = vector.broadcast %cst_35 : f32 to vector<2x8xf32>
    %149 = arith.addf %147, %148 : vector<2x8xf32>
    %cst_36 = arith.constant 5.000000e-01 : f32
    %150 = vector.broadcast %cst_36 : f32 to vector<2x8xf32>
    %151 = arith.divf %150, %120 : vector<2x8xf32>
    %152 = arith.mulf %76, %151 : vector<2x8xf32>
    %153 = arith.subf %149, %152 : vector<2x8xf32>
    %154 = arith.subf %153, %116 : vector<2x8xf32>
    %155 = arith.mulf %146, %118 : vector<2x8xf32>
    %cst_37 = arith.constant 5.000000e-01 : f32
    %156 = vector.broadcast %cst_37 : f32 to vector<2x8xf32>
    %157 = arith.addf %155, %156 : vector<2x8xf32>
    %cst_38 = arith.constant 5.000000e-01 : f32
    %158 = vector.broadcast %cst_38 : f32 to vector<2x8xf32>
    %159 = arith.divf %158, %122 : vector<2x8xf32>
    %160 = arith.mulf %75, %159 : vector<2x8xf32>
    %161 = arith.subf %157, %160 : vector<2x8xf32>
    %162 = arith.subf %161, %118 : vector<2x8xf32>
    %cst_39 = arith.constant 2.000000e+00 : f32
    %163 = vector.broadcast %cst_39 : f32 to vector<2x8xf32>
    %164 = arith.mulf %163, %118 : vector<2x8xf32>
    %165 = arith.select %106, %164, %154 : vector<2x8xi1>, vector<2x8xf32>
    %cst_40 = arith.constant 1.000000e+00 : f32
    %166 = vector.broadcast %cst_40 : f32 to vector<2x8xf32>
    %167 = arith.select %108, %166, %165 : vector<2x8xi1>, vector<2x8xf32>
    %cst_41 = arith.constant 2.000000e+00 : f32
    %168 = vector.broadcast %cst_41 : f32 to vector<2x8xf32>
    %169 = arith.mulf %168, %116 : vector<2x8xf32>
    %170 = arith.select %108, %169, %162 : vector<2x8xi1>, vector<2x8xf32>
    %cst_42 = arith.constant 1.000000e+00 : f32
    %171 = vector.broadcast %cst_42 : f32 to vector<2x8xf32>
    %172 = arith.select %106, %171, %170 : vector<2x8xi1>, vector<2x8xf32>
    %173 = vector.extract_strided_slice %167 {offsets = [0, 0], sizes = [1, 8], strides = [1, 1]} : vector<2x8xf32> to vector<1x8xf32>
    %174 = vector.extract_strided_slice %167 {offsets = [1, 0], sizes = [1, 8], strides = [1, 1]} : vector<2x8xf32> to vector<1x8xf32>
    %175 = vector.extract_strided_slice %172 {offsets = [0, 0], sizes = [1, 8], strides = [1, 1]} : vector<2x8xf32> to vector<1x8xf32>
    %176 = vector.extract_strided_slice %172 {offsets = [1, 0], sizes = [1, 8], strides = [1, 1]} : vector<2x8xf32> to vector<1x8xf32>
    %177 = arith.mulf %100, %74 : vector<1x8xf32>
    %178 = arith.mulf %177, %175 : vector<1x8xf32>
    %179 = arith.mulf %104, %73 : vector<1x8xf32>
    %180 = arith.mulf %179, %173 : vector<1x8xf32>
    %181 = tpu.concatenate %178, %180 in 0 : vector<1x8xf32>, vector<1x8xf32> -> vector<2x8xf32>
    %182 = tpu.concatenate %174, %176 in 0 : vector<1x8xf32>, vector<1x8xf32> -> vector<2x8xf32>
    %cst_43 = arith.constant 1.000000e+00 : f32
    %183 = vector.broadcast %cst_43 : f32 to vector<2x8xf32>
    %184 = arith.addf %183, %181 : vector<2x8xf32>
    %185 = arith.mulf %184, %182 : vector<2x8xf32>
    %186 = math.log %185 : vector<2x8xf32>
    %cst_44 = arith.constant 0.000000e+00 : f32
    %187 = vector.broadcast %cst_44 : f32 to vector<2x8xf32>
    %188 = arith.subf %187, %186 : vector<2x8xf32>
    %cst_45 = arith.constant 1.000000e+00 : f32
    %189 = vector.broadcast %cst_45 : f32 to vector<2x8xf32>
    %190 = arith.subf %182, %189 : vector<2x8xf32>
    %cst_46 = arith.constant 5.000000e-01 : f32
    %191 = vector.broadcast %cst_46 : f32 to vector<2x8xf32>
    %192 = arith.mulf %190, %191 : vector<2x8xf32>
    %193 = arith.addf %188, %192 : vector<2x8xf32>
    %cst_47 = arith.constant 0.000000e+00 : f32
    %194 = vector.broadcast %cst_47 : f32 to vector<2x8xf32>
    %195 = arith.cmpf oeq, %72, %194 : vector<2x8xf32>
    %196 = arith.mulf %72, %193 : vector<2x8xf32>
    %cst_48 = arith.constant 0.000000e+00 : f32
    %197 = vector.broadcast %cst_48 : f32 to vector<2x8xf32>
    %198 = arith.select %195, %197, %196 : vector<2x8xi1>, vector<2x8xf32>
    %cst_49 = arith.constant 5.000000e-01 : f32
    %199 = vector.broadcast %cst_49 : f32 to vector<1x8xf32>
    %200 = arith.mulf %71, %199 : vector<1x8xf32>
    %cst_50 = arith.constant 1.000000e+00 : f32
    %201 = vector.broadcast %cst_50 : f32 to vector<1x8xf32>
    %202 = arith.subf %201, %173 : vector<1x8xf32>
    %203 = arith.mulf %73, %202 : vector<1x8xf32>
    %cst_51 = arith.constant 1.000000e+00 : f32
    %204 = vector.broadcast %cst_51 : f32 to vector<1x8xf32>
    %205 = arith.subf %204, %175 : vector<1x8xf32>
    %206 = arith.mulf %74, %205 : vector<1x8xf32>
    %207 = arith.addf %203, %206 : vector<1x8xf32>
    %208 = arith.mulf %200, %207 : vector<1x8xf32>
    %209 = vector.extract_strided_slice %198 {offsets = [0, 0], sizes = [1, 8], strides = [1, 1]} : vector<2x8xf32> to vector<1x8xf32>
    %210 = vector.extract_strided_slice %198 {offsets = [1, 0], sizes = [1, 8], strides = [1, 1]} : vector<2x8xf32> to vector<1x8xf32>
    %211 = arith.addf %209, %210 : vector<1x8xf32>
    %212 = arith.addf %211, %208 : vector<1x8xf32>
    %213 = arith.addf %212, %70 : vector<1x8xf32>
    %c0_52 = arith.constant 0 : index
    %c0_53 = arith.constant 0 : index
    %214 = vector.load %arg4[%c0_52, %c0_53] : memref<1x8xf32, #tpu.memory_space<vmem>>, vector<1x8xf32>
    tpu.vector_store %arg4[%c0_52, %c0_53], %213 {strides = array<i32>} : memref<1x8xf32, #tpu.memory_space<vmem>>, vector<1x8xf32>,
    return
  }
  func.func @transform_0(%arg0: i32) -> (i32, i32, i32) {
    %c0_i32 = arith.constant 0 : i32
    %c0_i32_0 = arith.constant 0 : i32
    %c0_i32_1 = arith.constant 0 : i32
    return %c0_i32, %c0_i32_0, %arg0 : i32, i32, i32
  }
  func.func @transform_1(%arg0: i32) -> (i32, i32) {
    %c0_i32 = arith.constant 0 : i32
    %c0_i32_0 = arith.constant 0 : i32
    return %c0_i32, %arg0 : i32, i32
  }
  func.func @transform_2(%arg0: i32) -> (i32, i32) {
    %c0_i32 = arith.constant 0 : i32
    %c0_i32_0 = arith.constant 0 : i32
    %c0_i32_1 = arith.constant 0 : i32
    return %c0_i32, %c0_i32_0 : i32, i32
  }
  func.func @transform_3(%arg0: i32) -> (i32, i32) {
    %c0_i32 = arith.constant 0 : i32
    %c0_i32_0 = arith.constant 0 : i32
    return %c0_i32, %arg0 : i32, i32
  }
}

</mosaic_0001>

<llo_original>
// kernel: forward.1
$region0: #{forward.1}
  #allocation0 [shape = 'u32[]', space=smem, size = 0x4, offset = 0x4, fixed_abs, tag = 'smem constant byte address 0x4 - core index']
  #allocation1 [shape = 'u32[144,128]{1,0:T(1,128)}', space=vmem, size = 0x12000, scoped, tag = 'internal scratch']
  %s0 = inlined_call_operand.vmem [shape: f32[2,32,8], index: 0, kind: input, shape index: {}]
  %s1 = inlined_call_operand.vmem [shape: f32[16,8], index: 1, kind: input, shape index: {}]
  %s2 = inlined_call_operand.vmem [shape: f32[32,5], index: 2, kind: input, shape index: {}]
  %s3 = inlined_call_operand.hbm [shape: f32[1,8], index: 3, kind: output, shape index: {}]
  %s4 = sld [smem:[#allocation0]]
  $region22: #{forward.1} parent=0
    _
  %s6 = ssub.s32 1, %s4
  %s7 = scalar_select 0, %s6, %s4
  $region1: #{forward.1} parent=0
    #allocation2 [shape = 'u8[512]{0}', space=vmem, size = 0x400, scoped, tag = 'output window, operand 0, single buffered']
    #allocation3 [shape = 's32[1]{0}', space=sflag, size = 0x4, scoped, tag = 'scoped memory for forward.1']
    %8 = vsyncpa [#allocation3], 0
    // Predicated region
    $region2: #{forward.1} parent=1 // pred_check
      _
    $region3: #{forward.1} parent=1 // pred_check_branch
      %10 = sbr.rel (0) target = $region5
    $region4: #{forward.1} parent=1 // pred_region
      _
    $region5: #{forward.1} parent=1 // pred_fallthru
      _
    // Predicated region
    $region6: #{forward.1} parent=1 // pred_check
      _
    $region7: #{forward.1} parent=1 // pred_check_branch
      %12 = sbr.rel (0) target = $region9
    $region8: #{forward.1} parent=1 // pred_region
      _
    $region9: #{forward.1} parent=1 // pred_fallthru
      _
    // Predicated region
    $region10: #{forward.1} parent=1 // pred_check
      _
    $region11: #{forward.1} parent=1 // pred_check_branch
      %14 = sbr.rel (0) target = $region13
    $region12: #{forward.1} parent=1 // pred_region
      _
    $region13: #{forward.1} parent=1 // pred_fallthru
      _
    %v15 = vld [vmem:[%s0] sm:$0xff]
    %v16 = vld [vmem:[%s0 + $0x8] sm:$0xff]
    %v17 = vld [vmem:[%s0 + $0x10] sm:$0xff]
    %v18 = vld [vmem:[%s0 + $0x18] sm:$0xff]
    %s19 = scalar_lea.vmem %s0, 32
    %v20 = vld [vmem:[%s19] sm:$0xff]
    %v21 = vld [vmem:[%s19 + $0x8] sm:$0xff]
    %v22 = vld [vmem:[%s19 + $0x10] sm:$0xff]
    %v23 = vld [vmem:[%s19 + $0x18] sm:$0xff]
    %v24 = vmax.f32 %v15, 0.0
    %v25 = vmax.f32 %v16, 0.0
    %v26 = vmax.f32 %v17, 0.0
    %v27 = vmax.f32 %v18, 0.0
    %v28 = vmax.f32 %v20, 0.0
    %v29 = vmax.f32 %v21, 0.0
    %v30 = vmax.f32 %v22, 0.0
    %v31 = vmax.f32 %v23, 0.0
    %v32 = vld [vmem:[%s2] sm:$0xff]
    %v33 = vld [vmem:[%s2 + $0x8] sm:$0xff]
    %v34 = vld [vmem:[%s2 + $0x10] sm:$0xff]
    %v35 = vld [vmem:[%s2 + $0x18] sm:$0xff]
    %v36 = vmul.f32 %v24, %v28
    %v37 = vmul.f32 %v25, %v29
    %v38 = vmul.f32 %v26, %v30
    %v39 = vmul.f32 %v27, %v31
    %41 = vset.pattern.permute.xlu0 0
    %42 = vperm.xlu0 %41, %v32
    %v43 = vpop.permute.xlu0 %42
    %46 = vset.pattern.permute.xlu0 0
    %47 = vperm.xlu0 %46, %v33
    %v48 = vpop.permute.xlu0 %47
    %51 = vset.pattern.permute.xlu0 0
    %52 = vperm.xlu0 %51, %v34
    %v53 = vpop.permute.xlu0 %52
    %56 = vset.pattern.permute.xlu0 0
    %57 = vperm.xlu0 %56, %v35
    %v58 = vpop.permute.xlu0 %57
    %v60 = vmul.f32 %v36, %v43
    %v61 = vmul.f32 %v37, %v48
    %v62 = vmul.f32 %v38, %v53
    %v63 = vmul.f32 %v39, %v58
    %v64 = vsub.f32 %v15, %v20
    %v65 = vsub.f32 %v16, %v21
    %v66 = vsub.f32 %v17, %v22
    %v67 = vsub.f32 %v18, %v23
    %v68 = vmul.f32 %v64, %v64
    %v69 = vmul.f32 %v65, %v65
    %v70 = vmul.f32 %v66, %v66
    %v71 = vmul.f32 %v67, %v67
    %72 = vset.pattern.permute.xlu0 1
    %73 = vperm.xlu0 %72, %v32
    %v74 = vpop.permute.xlu0 %73
    %76 = vset.pattern.permute.xlu0 1
    %77 = vperm.xlu0 %76, %v33
    %v78 = vpop.permute.xlu0 %77
    %80 = vset.pattern.permute.xlu0 1
    %81 = vperm.xlu0 %80, %v34
    %v82 = vpop.permute.xlu0 %81
    %84 = vset.pattern.permute.xlu0 1
    %85 = vperm.xlu0 %84, %v35
    %v86 = vpop.permute.xlu0 %85
    %v88 = vmul.f32 %v68, %v74
    %v89 = vmul.f32 %v69, %v78
    %v90 = vmul.f32 %v70, %v82
    %v91 = vmul.f32 %v71, %v86
    %v92 = vadd.f32 %v60, %v88
    %v93 = vadd.f32 %v61, %v89
    %v94 = vadd.f32 %v62, %v90
    %v95 = vadd.f32 %v63, %v91
    %v96 = vmul.f32 %v24, %v24
    %v97 = vmul.f32 %v25, %v25
    %v98 = vmul.f32 %v26, %v26
    %v99 = vmul.f32 %v27, %v27
    %v100 = vmul.f32 %v96, %v43
    %v101 = vmul.f32 %v97, %v48
    %v102 = vmul.f32 %v98, %v53
    %v103 = vmul.f32 %v99, %v58
    %v104 = vsub.f32 %v92, %v100
    %v105 = vsub.f32 %v93, %v101
    %v106 = vsub.f32 %v94, %v102
    %v107 = vsub.f32 %v95, %v103
    %v108 = vmul.f32 %v28, %v28
    %v109 = vmul.f32 %v29, %v29
    %v110 = vmul.f32 %v30, %v30
    %v111 = vmul.f32 %v31, %v31
    %v112 = vmul.f32 %v108, %v43
    %v113 = vmul.f32 %v109, %v48
    %v114 = vmul.f32 %v110, %v53
    %v115 = vmul.f32 %v111, %v58
    %v116 = vsub.f32 %v92, %v112
    %v117 = vsub.f32 %v93, %v113
    %v118 = vsub.f32 %v94, %v114
    %v119 = vsub.f32 %v95, %v115
    %v120 = vld [vmem:[%s1] sm:$0xff]
    %v121 = vld [vmem:[%s1 + $0x8] sm:$0xff]
    %v122 = vmul.f32 %v120, %v120
    %v123 = vmul.f32 %v122, 0.5
    %124 = vset.pattern.permute.xlu0 2
    %125 = vperm.xlu0 %124, %v32
    %v126 = vpop.permute.xlu0 %125
    %128 = vset.pattern.permute.xlu0 2
    %129 = vperm.xlu0 %128, %v33
    %v130 = vpop.permute.xlu0 %129
    %132 = vset.pattern.permute.xlu0 2
    %133 = vperm.xlu0 %132, %v34
    %v134 = vpop.permute.xlu0 %133
    %136 = vset.pattern.permute.xlu0 2
    %137 = vperm.xlu0 %136, %v35
    %v138 = vpop.permute.xlu0 %137
    %140 = vset.pattern.permute.xlu0 3
    %141 = vperm.xlu0 %140, %v32
    %v142 = vpop.permute.xlu0 %141
    %144 = vset.pattern.permute.xlu0 3
    %145 = vperm.xlu0 %144, %v33
    %v146 = vpop.permute.xlu0 %145
    %148 = vset.pattern.permute.xlu0 3
    %149 = vperm.xlu0 %148, %v34
    %v150 = vpop.permute.xlu0 %149
    %152 = vset.pattern.permute.xlu0 3
    %153 = vperm.xlu0 %152, %v35
    %v154 = vpop.permute.xlu0 %153
    %v156 = vlaneseq
    %v157 = vshrl.u32 %v156, 7
    %v158 = vsub.s32 0, %v157
    %v159 = vrot.slane %v120, %v158
    %v160 = vmul.f32 %v142, %v159
    %v161 = vmul.f32 %v146, %v159
    %v162 = vmul.f32 %v150, %v159
    %v163 = vmul.f32 %v154, %v159
    %v164 = vadd.f32 %v126, %v160
    %v165 = vadd.f32 %v130, %v161
    %v166 = vadd.f32 %v134, %v162
    %v167 = vadd.f32 %v138, %v163
    %168 = vset.pattern.permute.xlu0 4
    %169 = vperm.xlu0 %168, %v32
    %v170 = vpop.permute.xlu0 %169
    %172 = vset.pattern.permute.xlu0 4
    %173 = vperm.xlu0 %172, %v33
    %v174 = vpop.permute.xlu0 %173
    %176 = vset.pattern.permute.xlu0 4
    %177 = vperm.xlu0 %176, %v34
    %v178 = vpop.permute.xlu0 %177
    %180 = vset.pattern.permute.xlu0 4
    %181 = vperm.xlu0 %180, %v35
    %v182 = vpop.permute.xlu0 %181
    %v184 = vlaneseq
    %v185 = vshrl.u32 %v184, 7
    %v186 = vsub.s32 0, %v185
    %v187 = vrot.slane %v123, %v186
    %v188 = vmul.f32 %v170, %v187
    %v189 = vmul.f32 %v174, %v187
    %v190 = vmul.f32 %v178, %v187
    %v191 = vmul.f32 %v182, %v187
    %v192 = vadd.f32 %v164, %v188
    %v193 = vadd.f32 %v165, %v189
    %v194 = vadd.f32 %v166, %v190
    %v195 = vadd.f32 %v167, %v191
    %v196 = vmul.f32 %v116, %v192
    %v197 = vmul.f32 %v117, %v193
    %v198 = vmul.f32 %v118, %v194
    %v199 = vmul.f32 %v119, %v195
    %vm200 = vcmask 64512
    %v201 = vsel %vm200, %v196, 0.0
    %v202 = vsel %vm200, %v197, 0.0
    %v203 = vadd.f32 %v201, %v202
    %v204 = vsel %vm200, %v198, 0.0
    %v205 = vadd.f32 %v203, %v204
    %v206 = vsel %vm200, %v199, 0.0
    %v207 = vadd.f32 %v205, %v206
    %v208 = vrot.slane %v207, 4
    %v209 = vadd.f32 %v207, %v208
    %v210 = vrot.slane %v209, 2
    %v211 = vadd.f32 %v209, %v210
    %v212 = vrot.slane %v211, 1
    %v213 = vadd.f32 %v211, %v212
    %v214 = vmul.f32 %v104, %v192
    %v215 = vmul.f32 %v105, %v193
    %v216 = vmul.f32 %v106, %v194
    %v217 = vmul.f32 %v107, %v195
    %v218 = vsel %vm200, %v214, 0.0
    %v219 = vsel %vm200, %v215, 0.0
    %v220 = vadd.f32 %v218, %v219
    %v221 = vsel %vm200, %v216, 0.0
    %v222 = vadd.f32 %v220, %v221
    %v223 = vsel %vm200, %v217, 0.0
    %v224 = vadd.f32 %v222, %v223
    %v225 = vrot.slane %v224, 4
    %v226 = vadd.f32 %v224, %v225
    %v227 = vrot.slane %v226, 2
    %v228 = vadd.f32 %v226, %v227
    %v229 = vrot.slane %v228, 1
    %v230 = vadd.f32 %v228, %v229
    %v231 = vmax.f32 %v121, 0.0
    %v232 = vmin.f32 %v231, 1.0
    %v234 = vrot.slane %v232, 2
    %v236 = vsub.f32 %v232, %v234
    %v237 = vmul.f32 %v236, %v236
    %v239 = vrot.slane %v237, 1
    %v241 = vadd.f32 %v237, %v239
    %v242 = vsub.f32 0.0, %v241
    %v243 = vmul.f32 %v242, %v213
    %v244 = vmul.f32 %v243, 1.442695
    %v245 = vpow.pop %v244
    %v246 = vmul.f32 %v213, %v245
    %v247 = vadd.f32 %v230, %v246
    %v248 = vmul.f32 %v120, 1960.0
    %v249 = vmul.f32 %v248, 1.442695
    %v250 = vpow.pop %v249
    %v251 = vsub.f32 %v250, 1.0
    %v252 = vmul.f32 %v251, 0.034
    %vm253 = vcmp.gt.f32.partialorder %v121, 20.0
    %v254 = vmin.f32 %v121, 20.0
    %v255 = vmul.f32 %v254, 1.442695
    %v256 = vpow.pop %v255
    %v257 = vadd.f32 %v256, 1.0
    %v258 = vlog2.pop %v257
    %v259 = vmul.f32 %v258, 0.6931472
    %v260 = vmul.f32 -0.5, %v256
    %v261 = vadd.f32 %v260, 1.0
    %v262 = vmul.f32 %v261, %v256
    %v263 = vand.u32 2147483647, %v256
    %vm264 = vcmp.lt.f32.partialorder %v263, 0.0004427343
    %v265 = vsel %vm264, %v262, %v259
    %v266 = vsel %vm253, %v121, %v265
    %v268 = vrot.slane %v266, 2
    %v270 = vmul.f32 %v266, %v268
    %v271 = vlaneseq
    %v272 = vshrl.u32 %v271, 7
    %v273 = vsub.s32 0, %v272
    %v274 = vrot.slane %v252, %v273
    %v275 = vmul.f32 %v270, %v274
    %v276 = vrot.slane %v266, 1
    %v278 = vmul.f32 %v266, %v276
    %v280 = vrot.slane %v252, 7
    %v282 = vmul.f32 %v278, %v280
    %v283 = vrot.slane %v266, 3
    %v285 = vmul.f32 %v266, %v283
    %v286 = vmul.f32 %v285, %v252
    %vm287 = vcmp.eq.f32.partialorder %v120, 0.0
    %v289 = vrot.slane %v120, 4
    %v291 = vmul.f32 %v275, %v289
    %v293 = vrot.slane %v291, 4
    %v295 = vsel %vm287, 1.0, %v293
    %v296 = vrot.slane %v120, 6
    %v298 = vmul.f32 %v275, %v296
    %v300 = vrot.slane %v298, 2
    %v302 = vsel %vm287, 1.0, %v300
    %v303 = vrcp.pop %v295
    %v304 = vmul.f32 0.5, %v303
    %v305 = vrcp.pop %v302
    %v306 = vmul.f32 0.5, %v305
    %v307 = vsel %vm287, 1.0, %v120
    %v308 = vmul.f32 %v295, %v295
    %v309 = vmul.f32 %v295, 2.0
    %v310 = vsub.f32 %v302, 1.0
    %v312 = vrot.slane %v310, 2
    %v314 = vmul.f32 %v309, %v312
    %v315 = vsub.f32 %v308, %v314
    %v316 = vadd.f32 %v302, 1.0
    %v317 = vmul.f32 %v316, %v316
    %v319 = vrot.slane %v317, 2
    %v321 = vadd.f32 %v315, %v319
    %v322 = vrsqrt.pop %v321
    %v323 = vmul.f32 %v321, %v322
    %vm324 = vcmp.eq.f32.partialorder %v321, inf
    %v325 = vsel %vm324, %v321, %v323
    %vm326 = vcmp.eq.f32.partialorder %v321, 0.0
    %v327 = vand.u32 %v321, 2147483648
    %v328 = vsel %vm326, %v327, %v325
    %v329 = vmul.f32 %v302, %v302
    %v330 = vmul.f32 %v302, 2.0
    %v331 = vsub.f32 %v295, 1.0
    %v333 = vrot.slane %v331, 6
    %v335 = vmul.f32 %v330, %v333
    %v336 = vsub.f32 %v329, %v335
    %v337 = vadd.f32 %v295, 1.0
    %v338 = vmul.f32 %v337, %v337
    %v340 = vrot.slane %v338, 6
    %v342 = vadd.f32 %v336, %v340
    %v343 = vrsqrt.pop %v342
    %v344 = vmul.f32 %v342, %v343
    %vm345 = vcmp.eq.f32.partialorder %v342, inf
    %v346 = vsel %vm345, %v342, %v344
    %vm347 = vcmp.eq.f32.partialorder %v342, 0.0
    %v348 = vand.u32 %v342, 2147483648
    %v349 = vsel %vm347, %v348, %v346
    %v350 = vmul.f32 %v328, %v304
    %v351 = vadd.f32 %v350, 0.5
    %v352 = vrcp.pop %v307
    %v353 = vmul.f32 0.5, %v352
    %v355 = vrot.slane %v353, 6
    %v357 = vmul.f32 %v120, %v355
    %v359 = vrot.slane %v357, 2
    %v361 = vsub.f32 %v351, %v359
    %v362 = vsub.f32 %v361, %v304
    %v363 = vmul.f32 %v349, %v306
    %v364 = vadd.f32 %v363, 0.5
    %v365 = vrot.slane %v353, 2
    %v367 = vmul.f32 %v120, %v365
    %v369 = vrot.slane %v367, 6
    %v371 = vsub.f32 %v364, %v369
    %v372 = vsub.f32 %v371, %v306
    %v373 = vmul.f32 %v306, 2.0
    %v375 = vrot.slane %v373, 2
    %v377 = vsel %vm287, %v375, %v362
    %v379 = vrot.slane %v377, 6
    %v381 = vsel %vm287, 1.0, %v379
    %v382 = vmul.f32 %v304, 2.0
    %v384 = vrot.slane %v382, 6
    %v386 = vsel %vm287, %v384, %v372
    %v388 = vrot.slane %v386, 2
    %v390 = vsel %vm287, 1.0, %v388
    %v391 = vrot.slane %v120, 5
    %v393 = vmul.f32 %v282, %v391
    %v395 = vrot.slane %v390, 3
    %v397 = vmul.f32 %v393, %v395
    %v398 = vmul.f32 %v286, %v289
    %v400 = vrot.slane %v381, 6
    %v402 = vmul.f32 %v398, %v400
    %v404 = vrot.slane %v397, 1
    %v407 = vrot.slane %v402, 7
    %vm409 = vcmask 1040384
    %v410 = vsel %vm409, %v404, %v407
    %v411 = vrot.slane %v381, 7
    %v413 = vrot.slane %v390, 4
    %v415 = vsel %vm409, %v411, %v413
    %v416 = vadd.f32 %v410, 1.0
    %v417 = vmul.f32 %v416, %v415
    %v418 = vlog2.pop %v417
    %v419 = vmul.f32 %v418, 0.6931472
    %v420 = vsub.f32 0.0, %v419
    %v421 = vsub.f32 %v415, 1.0
    %v422 = vmul.f32 %v421, 0.5
    %v423 = vadd.f32 %v420, %v422
    %v425 = vrot.slane %v423, 6
    %v427 = vmul.f32 %v120, %v425
    %v428 = vsel %vm287, 0.0, %v427
    %v429 = vmul.f32 %v120, 0.5
    %v430 = vsub.f32 1.0, %v381
    %v432 = vrot.slane %v430, 2
    %v434 = vmul.f32 %v120, %v432
    %v435 = vsub.f32 1.0, %v390
    %v437 = vrot.slane %v435, 6
    %v439 = vmul.f32 %v120, %v437
    %v441 = vrot.slane %v439, 2
    %v443 = vadd.f32 %v434, %v441
    %v445 = vrot.slane %v443, 3
    %v447 = vmul.f32 %v429, %v445
    %v449 = vrot.slane %v428, 1
    %v451 = vadd.f32 %v428, %v449
    %v453 = vrot.slane %v447, 7
    %v455 = vadd.f32 %v451, %v453
    %v457 = vrot.slane %v247, 2
    %v459 = vadd.f32 %v455, %v457
    %vm460 = vcmask 59394
    %461 = vst.msk [vmem:[#allocation2 - $0x2] sm:$0x4] %vm460, %v459
    // Predicated region
    $region14: #{forward.1} parent=1 // pred_check
      _
    $region15: #{forward.1} parent=1 // pred_check_branch
      %463 = sbr.rel (0) target = $region17
    $region16: #{forward.1} parent=1 // pred_region
      %s465 = ssub.s32 16, 16
      %466 = vsyncadd [#allocation3], %s465
      %s468 = sshll.u32 [#allocation2], 4
      %s469 = int_to_ptr.vmem [resolvable:$true] %s468
      %471 = dma.vmem_to_hbm [thread:$0]  %s469, 16, %s3, [#allocation3]
    $region17: #{forward.1} parent=1 // pred_fallthru
      _
    // Predicated region
    $region18: #{forward.1} parent=1 // pred_check
      _
    $region19: #{forward.1} parent=1 // pred_check_branch
      %473 = sbr.rel (0) target = $region21
    $region20: #{forward.1} parent=1 // pred_region
      %474 = dma.done [#allocation3], 16
    $region21: #{forward.1} parent=1 // pred_fallthru
      _
    %475 = vsyncpa [#allocation3], 1

</llo_original>
